<compile_context>
chip_gen: v6e
topology: v6e:2x2x1
jax: 0.10.0
libtpu: 0.0.40
codegen_flags: <defaults>
</compile_context>

<pallas_src>
import functools

import jax
import jax.numpy as jnp
from jax import lax
from jax.experimental import pallas as pl
from jax.experimental.pallas import tpu as pltpu


def _round_up(x, m):
    return ((x + m - 1) // m) * m


def _reset_spike_kernel(gamma_ref, x_ref, z_ref, u_scr, zprev_scr, *, alpha, tt, unroll):
    """One grid step == one (batch-tile, n-tile, TT-timestep block).

    gamma_ref : (K, 128)          VMEM  reset_gamma tile
    x_ref     : (BB, TT, K, 128)  VMEM  x block
    z_ref     : (BB, TT, K, 128)  VMEM  z block (output)
    u_scr     : (BB, K, 128) f32  VMEM  membrane potential (carried across time blocks)
    zprev_scr : (BB, K, 128) f32  VMEM  previous spike      (carried across time blocks)
    """
    t_blk = pl.program_id(2)                      # time-block index (last, "arbitrary")
    BB, _, K, L = x_ref.shape

    # Hoist gamma load + broadcast out of the time loop (JAX does not CSE
    # broadcast_in_dim; per-step broadcasting would pay it every iteration).
    gamma = jnp.broadcast_to(
        gamma_ref[...].astype(jnp.float32).reshape(1, K, L), (BB, K, L)
    )
    one_minus_alpha = 1.0 - alpha

    def step(i, carry):
        u, z_prev = carry                                   # register-carried state
        xt = x_ref[:, i].astype(jnp.float32)                # (BB, K, 128) full tiles
        u = alpha * u + one_minus_alpha * xt - z_prev * gamma
        z = jnp.where(u > 0.0, 1.0, 0.0)
        z_ref[:, i] = z.astype(z_ref.dtype)                 # unmasked full-tile store
        return (u, z)

    @pl.when(t_blk == 0)
    def _():
        # First time block of this (batch-tile, n-tile) sweep: z0 = (x0 > 0),
        # u0 = 0 (eval path), then run the recurrence from i = 1.
        x0 = x_ref[:, 0].astype(jnp.float32)
        z0 = jnp.where(x0 > 0.0, 1.0, 0.0)
        z_ref[:, 0] = z0.astype(z_ref.dtype)
        u_f, z_f = lax.fori_loop(
            1, tt, step, (jnp.zeros_like(z0), z0),
            unroll=max(1, min(unroll, tt - 1)))
        u_scr[...] = u_f
        zprev_scr[...] = z_f

    @pl.when(t_blk > 0)
    def _():
        # Hot path: branch-free, register-carried loop over the full block.
        u_f, z_f = lax.fori_loop(
            0, tt, step, (u_scr[...], zprev_scr[...]),
            unroll=max(1, min(unroll, tt)))
        u_scr[...] = u_f
        zprev_scr[...] = z_f


def reset_spike_forward(x, reset_gamma, *, alpha=0.9, time_block=64,
                        neuron_block=1024, unroll=8, vmem_budget_bytes=40 << 20):
    """x: (B, T, N), reset_gamma: (N,)  ->  z: (B, T, N) (same dtype as x)."""
    B, T, N = x.shape
    itemsize = jnp.dtype(x.dtype).itemsize

    # ---- Neuron (lane) tiling.  The last dim is split into (K, 128) so each
    # per-timestep slab is a dense (K, 128) tile.  When the neuron axis is
    # tiled across the grid, TN is a multiple of 1024 so K is a multiple of 8.
    Np0 = _round_up(N, 128)
    if Np0 <= max(neuron_block, 1024):
        TN = Np0                                        # single n-tile; K == full dim
    else:
        TN = max(1024, (neuron_block // 1024) * 1024)   # K multiple of 8 when tiled
    Np = _round_up(Np0, TN)
    K = TN // 128
    Ktot = Np // 128
    n_tiles = Np // TN

    # ---- Batch tiling: extra leading "parallel" axis so both v7x TensorCores
    # get work even when there is a single n-tile; also bounds per-block VMEM.
    BB = B
    if n_tiles < 2 and B % 2 == 0 and B >= 2:
        BB = B // 2

    budget = int(vmem_budget_bytes)

    def _scratch_bytes(bb):
        # u + z_prev carries (f32, padded to 8 sublanes) + gamma tile.
        return (2 * bb + 2) * max(K, 8) * 128 * 4

    # Ensure even a single double-buffered timestep fits the budget (v7x: 64 MiB).
    while BB > 1 and 4 * BB * TN * itemsize + _scratch_bytes(BB) + (2 << 20) > budget:
        BB = (BB + 1) // 2
    Bp = _round_up(B, BB)

    # ---- Time blocking derived from the VMEM budget (x + z, double-buffered).
    per_t = 4 * BB * TN * itemsize
    avail = max(budget - _scratch_bytes(BB) - (2 << 20), per_t)
    max_tt = max(1, avail // per_t)
    TT = int(max(1, min(time_block, T, max_tt)))
    Tp = _round_up(T, TT)

    # ---- Pad, then free contiguous reshape to the lane/sublane-dense layout.
    x_p = x
    if (Bp, Tp, Np) != (B, T, N):
        x_p = jnp.pad(x, ((0, Bp - B), (0, Tp - T), (0, Np - N)))
    x_p = x_p.reshape(Bp, Tp, Ktot, 128)

    g = reset_gamma if Np == N else jnp.pad(reset_gamma, (0, Np - N))
    g = g.reshape(Ktot, 128)

    grid = (Bp // BB, Np // TN, Tp // TT)   # (parallel, parallel, sequential time)

    kernel = functools.partial(_reset_spike_kernel, alpha=float(alpha),
                               tt=TT, unroll=int(unroll))

    # VMEM limit from the actual block sizes (double-buffered x + z + scratch).
    blk_bytes = BB * TT * TN * itemsize
    est = 4 * blk_bytes + _scratch_bytes(BB) + (2 << 20)
    vmem_limit = int(min(max(est, 16 << 20), 56 << 20))

    z_p = pl.pallas_call(
        kernel,
        out_shape=jax.ShapeDtypeStruct((Bp, Tp, Ktot, 128), x.dtype),
        grid_spec=pltpu.PrefetchScalarGridSpec(
            num_scalar_prefetch=0,
            grid=grid,
            in_specs=[
                pl.BlockSpec((K, 128), lambda b, n, t: (n, 0)),                # gamma
                pl.BlockSpec((BB, TT, K, 128), lambda b, n, t: (b, t, n, 0)),  # x block
            ],
            out_specs=pl.BlockSpec((BB, TT, K, 128), lambda b, n, t: (b, t, n, 0)),
            scratch_shapes=[
                pltpu.VMEM((BB, K, 128), jnp.float32),   # u (membrane potential)
                pltpu.VMEM((BB, K, 128), jnp.float32),   # z_{t-1}
            ],
        ),
        compiler_params=pltpu.CompilerParams(
            # batch / neuron tiles are independent -> parallel (2 TCs on v7x);
            # time is a sequential recurrence -> arbitrary, and last in the grid.
            dimension_semantics=("parallel", "parallel", "arbitrary"),
            vmem_limit_bytes=vmem_limit,
        ),
    )(g, x_p)

    z = z_p.reshape(Bp, Tp, Np)[:B, :T, :N]
    return z


def _reference(x, reset_gamma, alpha=0.9):
    """Pure-JAX reference mirroring the PyTorch loop (eval path)."""
    B, T, N = x.shape
    z0 = jnp.where(x[:, 0, :] > 0.0, 1.0, 0.0).astype(x.dtype)
    u0 = jnp.zeros((B, N), x.dtype)

    def step(carry, xt):
        u, z_prev = carry
        u = alpha * u + (1.0 - alpha) * xt - z_prev * reset_gamma
        z = jnp.where(u > 0.0, 1.0, 0.0).astype(x.dtype)
        return (u, z), z

    if T == 1:
        return z0[:, None, :]
    xs = jnp.transpose(x[:, 1:, :], (1, 0, 2))  # (T-1, B, N)
    _, zs = lax.scan(step, (u0, z0), xs)
    return jnp.concatenate([z0[:, None, :], jnp.transpose(zs, (1, 0, 2))], axis=1)


if __name__ == "__main__":
    key = jax.random.PRNGKey(0)
    k1, k2 = jax.random.split(key)
    alpha = 0.9

    # Case 1: module-sized small shapes (B=2, T=8, N=32); reset_gamma = ones
    # per nn.Module.__init__.
    B, T, N = 2, 8, 32
    x = jax.random.normal(k1, (B, T, N), dtype=jnp.float32)
    reset_gamma = jnp.ones((N,), dtype=jnp.float32)
    z = jax.block_until_ready(reset_spike_forward(x, reset_gamma, alpha=alpha))
    z_ref = _reference(x, reset_gamma, alpha=alpha)
    assert z.shape == (B, T, N)
    assert jnp.allclose(z, z_ref, atol=1e-6), "mismatch vs reference (case 1)"

    # Case 2: exercises time-block padding, carried state across time blocks,
    # multi-sublane neuron tiles, and the batch-parallel axis.
    B2, T2, N2 = 2, 20, 160
    x2 = jax.random.normal(k2, (B2, T2, N2), dtype=jnp.float32)
    g2 = jnp.full((N2,), 0.7, dtype=jnp.float32)
    z2 = jax.block_until_ready(
        reset_spike_forward(x2, g2, alpha=alpha, time_block=8))
    z2_ref = _reference(x2, g2, alpha=alpha)
    assert z2.shape == (B2, T2, N2)
    assert jnp.allclose(z2, z2_ref, atol=1e-6), "mismatch vs reference (case 2)"

    print("KERNEL_OK")
</pallas_src>

<mosaic_0001>
module attributes {stable_mosaic.version = 11 : i64} {
  func.func @_reset_spike_kernel(%arg0: i32, %arg1: i32, %arg2: i32, %arg3: memref<1x128xf32, #tpu.memory_space<vmem>>, %arg4: memref<1x8x1x128xf32, #tpu.memory_space<vmem>>, %arg5: memref<1x8x1x128xf32, #tpu.memory_space<vmem>>, %arg6: memref<1x1x128xf32, #tpu.memory_space<vmem>>, %arg7: memref<1x1x128xf32, #tpu.memory_space<vmem>>) attributes {dimension_semantics = [#tpu.dimension_semantics<parallel>, #tpu.dimension_semantics<parallel>, #tpu.dimension_semantics<arbitrary>], iteration_bounds = array<i64: 2, 1, 1>, scalar_prefetch = 0 : i64, scratch_operands = 2 : i64, tpu.core_type = #tpu.core_type<tc>, window_params = [{transform_indices = @transform_0, window_bounds = array<i64: 1, 128>}, {transform_indices = @transform_1, window_bounds = array<i64: 1, 8, 1, 128>}, {transform_indices = @transform_2, window_bounds = array<i64: 1, 8, 1, 128>}]} {
    %c0 = arith.constant 0 : index
    %c0_0 = arith.constant 0 : index
    %0 = vector.load %arg3[%c0, %c0_0] : memref<1x128xf32, #tpu.memory_space<vmem>>, vector<1x128xf32>
    %1 = vector.shape_cast %0 : vector<1x128xf32> to vector<1x1x128xf32>
    %c0_i32 = arith.constant 0 : i32
    %2 = arith.cmpi eq, %arg2, %c0_i32 : i32
    %3 = arith.extui %2 : i1 to i32
    %c0_i32_1 = arith.constant 0 : i32
    %4 = arith.cmpi ne, %3, %c0_i32_1 : i32
    scf.if %4 {
      %c0_4 = arith.constant 0 : index
      %c0_5 = arith.constant 0 : index
      %c0_6 = arith.constant 0 : index
      %c0_7 = arith.constant 0 : index
      %8 = vector.load %arg4[%c0_4, %c0_5, %c0_6, %c0_7] : memref<1x8x1x128xf32, #tpu.memory_space<vmem>>, vector<1x1x1x128xf32>
      %9 = vector.shape_cast %8 : vector<1x1x1x128xf32> to vector<1x1x128xf32>
      %cst = arith.constant 0.000000e+00 : f32
      %10 = vector.broadcast %cst : f32 to vector<1x1x128xf32>
      %11 = arith.cmpf ogt, %9, %10 : vector<1x1x128xf32>
      %cst_8 = arith.constant 1.000000e+00 : f32
      %cst_9 = arith.constant 0.000000e+00 : f32
      %12 = vector.broadcast %cst_8 : f32 to vector<1x1x128xf32>
      %13 = vector.broadcast %cst_9 : f32 to vector<1x1x128xf32>
      %14 = arith.select %11, %12, %13 : vector<1x1x128xi1>, vector<1x1x128xf32>
      %c0_10 = arith.constant 0 : index
      %c0_11 = arith.constant 0 : index
      %c0_12 = arith.constant 0 : index
      %c0_13 = arith.constant 0 : index
      %15 = vector.load %arg5[%c0_10, %c0_11, %c0_12, %c0_13] : memref<1x8x1x128xf32, #tpu.memory_space<vmem>>, vector<1x1x1x128xf32>
      %16 = vector.shape_cast %15 : vector<1x1x1x128xf32> to vector<1x1x128xf32>
      %17 = vector.shape_cast %14 : vector<1x1x128xf32> to vector<1x1x1x128xf32>
      tpu.vector_store %arg5[%c0_10, %c0_11, %c0_12, %c0_13], %17 {strides = array<i32>} : memref<1x8x1x128xf32, #tpu.memory_space<vmem>>, vector<1x1x1x128xf32>,
      %cst_14 = arith.constant 0.000000e+00 : f32
      %18 = vector.broadcast %cst_14 : f32 to vector<1x1x128xf32>
      %c1_i32 = arith.constant 1 : i32
      %c0_15 = arith.constant 0 : index
      %19 = arith.index_cast %c1_i32 : i32 to index
      %c0_16 = arith.constant 0 : index
      %c0_17 = arith.constant 0 : index
      %20 = vector.load %arg4[%c0_15, %19, %c0_16, %c0_17] : memref<1x8x1x128xf32, #tpu.memory_space<vmem>>, vector<1x1x1x128xf32>
      %21 = vector.shape_cast %20 : vector<1x1x1x128xf32> to vector<1x1x128xf32>
      %cst_18 = arith.constant 0.899999976 : f32
      %22 = vector.broadcast %cst_18 : f32 to vector<1x1x128xf32>
      %23 = arith.mulf %22, %18 : vector<1x1x128xf32>
      %cst_19 = arith.constant 1.000000e-01 : f32
      %24 = vector.broadcast %cst_19 : f32 to vector<1x1x128xf32>
      %25 = arith.mulf %24, %21 : vector<1x1x128xf32>
      %26 = arith.addf %23, %25 : vector<1x1x128xf32>
      %27 = arith.mulf %14, %1 : vector<1x1x128xf32>
      %28 = arith.subf %26, %27 : vector<1x1x128xf32>
      %cst_20 = arith.constant 0.000000e+00 : f32
      %29 = vector.broadcast %cst_20 : f32 to vector<1x1x128xf32>
      %30 = arith.cmpf ogt, %28, %29 : vector<1x1x128xf32>
      %cst_21 = arith.constant 1.000000e+00 : f32
      %cst_22 = arith.constant 0.000000e+00 : f32
      %31 = vector.broadcast %cst_21 : f32 to vector<1x1x128xf32>
      %32 = vector.broadcast %cst_22 : f32 to vector<1x1x128xf32>
      %33 = arith.select %30, %31, %32 : vector<1x1x128xi1>, vector<1x1x128xf32>
      %c0_23 = arith.constant 0 : index
      %34 = arith.index_cast %c1_i32 : i32 to index
      %c0_24 = arith.constant 0 : index
      %c0_25 = arith.constant 0 : index
      %35 = vector.load %arg5[%c0_23, %34, %c0_24, %c0_25] : memref<1x8x1x128xf32, #tpu.memory_space<vmem>>, vector<1x1x1x128xf32>
      %36 = vector.shape_cast %35 : vector<1x1x1x128xf32> to vector<1x1x128xf32>
      %37 = vector.shape_cast %33 : vector<1x1x128xf32> to vector<1x1x1x128xf32>
      tpu.vector_store %arg5[%c0_23, %34, %c0_24, %c0_25], %37 {strides = array<i32>} : memref<1x8x1x128xf32, #tpu.memory_space<vmem>>, vector<1x1x1x128xf32>,
      %c2_i32 = arith.constant 2 : i32
      %c0_26 = arith.constant 0 : index
      %38 = arith.index_cast %c2_i32 : i32 to index
      %c0_27 = arith.constant 0 : index
      %c0_28 = arith.constant 0 : index
      %39 = vector.load %arg4[%c0_26, %38, %c0_27, %c0_28] : memref<1x8x1x128xf32, #tpu.memory_space<vmem>>, vector<1x1x1x128xf32>
      %40 = vector.shape_cast %39 : vector<1x1x1x128xf32> to vector<1x1x128xf32>
      %cst_29 = arith.constant 0.899999976 : f32
      %41 = vector.broadcast %cst_29 : f32 to vector<1x1x128xf32>
      %42 = arith.mulf %41, %28 : vector<1x1x128xf32>
      %cst_30 = arith.constant 1.000000e-01 : f32
      %43 = vector.broadcast %cst_30 : f32 to vector<1x1x128xf32>
      %44 = arith.mulf %43, %40 : vector<1x1x128xf32>
      %45 = arith.addf %42, %44 : vector<1x1x128xf32>
      %46 = arith.mulf %33, %1 : vector<1x1x128xf32>
      %47 = arith.subf %45, %46 : vector<1x1x128xf32>
      %cst_31 = arith.constant 0.000000e+00 : f32
      %48 = vector.broadcast %cst_31 : f32 to vector<1x1x128xf32>
      %49 = arith.cmpf ogt, %47, %48 : vector<1x1x128xf32>
      %cst_32 = arith.constant 1.000000e+00 : f32
      %cst_33 = arith.constant 0.000000e+00 : f32
      %50 = vector.broadcast %cst_32 : f32 to vector<1x1x128xf32>
      %51 = vector.broadcast %cst_33 : f32 to vector<1x1x128xf32>
      %52 = arith.select %49, %50, %51 : vector<1x1x128xi1>, vector<1x1x128xf32>
      %c0_34 = arith.constant 0 : index
      %53 = arith.index_cast %c2_i32 : i32 to index
      %c0_35 = arith.constant 0 : index
      %c0_36 = arith.constant 0 : index
      %54 = vector.load %arg5[%c0_34, %53, %c0_35, %c0_36] : memref<1x8x1x128xf32, #tpu.memory_space<vmem>>, vector<1x1x1x128xf32>
      %55 = vector.shape_cast %54 : vector<1x1x1x128xf32> to vector<1x1x128xf32>
      %56 = vector.shape_cast %52 : vector<1x1x128xf32> to vector<1x1x1x128xf32>
      tpu.vector_store %arg5[%c0_34, %53, %c0_35, %c0_36], %56 {strides = array<i32>} : memref<1x8x1x128xf32, #tpu.memory_space<vmem>>, vector<1x1x1x128xf32>,
      %c3_i32 = arith.constant 3 : i32
      %c0_37 = arith.constant 0 : index
      %57 = arith.index_cast %c3_i32 : i32 to index
      %c0_38 = arith.constant 0 : index
      %c0_39 = arith.constant 0 : index
      %58 = vector.load %arg4[%c0_37, %57, %c0_38, %c0_39] : memref<1x8x1x128xf32, #tpu.memory_space<vmem>>, vector<1x1x1x128xf32>
      %59 = vector.shape_cast %58 : vector<1x1x1x128xf32> to vector<1x1x128xf32>
      %cst_40 = arith.constant 0.899999976 : f32
      %60 = vector.broadcast %cst_40 : f32 to vector<1x1x128xf32>
      %61 = arith.mulf %60, %47 : vector<1x1x128xf32>
      %cst_41 = arith.constant 1.000000e-01 : f32
      %62 = vector.broadcast %cst_41 : f32 to vector<1x1x128xf32>
      %63 = arith.mulf %62, %59 : vector<1x1x128xf32>
      %64 = arith.addf %61, %63 : vector<1x1x128xf32>
      %65 = arith.mulf %52, %1 : vector<1x1x128xf32>
      %66 = arith.subf %64, %65 : vector<1x1x128xf32>
      %cst_42 = arith.constant 0.000000e+00 : f32
      %67 = vector.broadcast %cst_42 : f32 to vector<1x1x128xf32>
      %68 = arith.cmpf ogt, %66, %67 : vector<1x1x128xf32>
      %cst_43 = arith.constant 1.000000e+00 : f32
      %cst_44 = arith.constant 0.000000e+00 : f32
      %69 = vector.broadcast %cst_43 : f32 to vector<1x1x128xf32>
      %70 = vector.broadcast %cst_44 : f32 to vector<1x1x128xf32>
      %71 = arith.select %68, %69, %70 : vector<1x1x128xi1>, vector<1x1x128xf32>
      %c0_45 = arith.constant 0 : index
      %72 = arith.index_cast %c3_i32 : i32 to index
      %c0_46 = arith.constant 0 : index
      %c0_47 = arith.constant 0 : index
      %73 = vector.load %arg5[%c0_45, %72, %c0_46, %c0_47] : memref<1x8x1x128xf32, #tpu.memory_space<vmem>>, vector<1x1x1x128xf32>
      %74 = vector.shape_cast %73 : vector<1x1x1x128xf32> to vector<1x1x128xf32>
      %75 = vector.shape_cast %71 : vector<1x1x128xf32> to vector<1x1x1x128xf32>
      tpu.vector_store %arg5[%c0_45, %72, %c0_46, %c0_47], %75 {strides = array<i32>} : memref<1x8x1x128xf32, #tpu.memory_space<vmem>>, vector<1x1x1x128xf32>,
      %c4_i32 = arith.constant 4 : i32
      %c0_48 = arith.constant 0 : index
      %76 = arith.index_cast %c4_i32 : i32 to index
      %c0_49 = arith.constant 0 : index
      %c0_50 = arith.constant 0 : index
      %77 = vector.load %arg4[%c0_48, %76, %c0_49, %c0_50] : memref<1x8x1x128xf32, #tpu.memory_space<vmem>>, vector<1x1x1x128xf32>
      %78 = vector.shape_cast %77 : vector<1x1x1x128xf32> to vector<1x1x128xf32>
      %cst_51 = arith.constant 0.899999976 : f32
      %79 = vector.broadcast %cst_51 : f32 to vector<1x1x128xf32>
      %80 = arith.mulf %79, %66 : vector<1x1x128xf32>
      %cst_52 = arith.constant 1.000000e-01 : f32
      %81 = vector.broadcast %cst_52 : f32 to vector<1x1x128xf32>
      %82 = arith.mulf %81, %78 : vector<1x1x128xf32>
      %83 = arith.addf %80, %82 : vector<1x1x128xf32>
      %84 = arith.mulf %71, %1 : vector<1x1x128xf32>
      %85 = arith.subf %83, %84 : vector<1x1x128xf32>
      %cst_53 = arith.constant 0.000000e+00 : f32
      %86 = vector.broadcast %cst_53 : f32 to vector<1x1x128xf32>
      %87 = arith.cmpf ogt, %85, %86 : vector<1x1x128xf32>
      %cst_54 = arith.constant 1.000000e+00 : f32
      %cst_55 = arith.constant 0.000000e+00 : f32
      %88 = vector.broadcast %cst_54 : f32 to vector<1x1x128xf32>
      %89 = vector.broadcast %cst_55 : f32 to vector<1x1x128xf32>
      %90 = arith.select %87, %88, %89 : vector<1x1x128xi1>, vector<1x1x128xf32>
      %c0_56 = arith.constant 0 : index
      %91 = arith.index_cast %c4_i32 : i32 to index
      %c0_57 = arith.constant 0 : index
      %c0_58 = arith.constant 0 : index
      %92 = vector.load %arg5[%c0_56, %91, %c0_57, %c0_58] : memref<1x8x1x128xf32, #tpu.memory_space<vmem>>, vector<1x1x1x128xf32>
      %93 = vector.shape_cast %92 : vector<1x1x1x128xf32> to vector<1x1x128xf32>
      %94 = vector.shape_cast %90 : vector<1x1x128xf32> to vector<1x1x1x128xf32>
      tpu.vector_store %arg5[%c0_56, %91, %c0_57, %c0_58], %94 {strides = array<i32>} : memref<1x8x1x128xf32, #tpu.memory_space<vmem>>, vector<1x1x1x128xf32>,
      %c5_i32 = arith.constant 5 : i32
      %c0_59 = arith.constant 0 : index
      %95 = arith.index_cast %c5_i32 : i32 to index
      %c0_60 = arith.constant 0 : index
      %c0_61 = arith.constant 0 : index
      %96 = vector.load %arg4[%c0_59, %95, %c0_60, %c0_61] : memref<1x8x1x128xf32, #tpu.memory_space<vmem>>, vector<1x1x1x128xf32>
      %97 = vector.shape_cast %96 : vector<1x1x1x128xf32> to vector<1x1x128xf32>
      %cst_62 = arith.constant 0.899999976 : f32
      %98 = vector.broadcast %cst_62 : f32 to vector<1x1x128xf32>
      %99 = arith.mulf %98, %85 : vector<1x1x128xf32>
      %cst_63 = arith.constant 1.000000e-01 : f32
      %100 = vector.broadcast %cst_63 : f32 to vector<1x1x128xf32>
      %101 = arith.mulf %100, %97 : vector<1x1x128xf32>
      %102 = arith.addf %99, %101 : vector<1x1x128xf32>
      %103 = arith.mulf %90, %1 : vector<1x1x128xf32>
      %104 = arith.subf %102, %103 : vector<1x1x128xf32>
      %cst_64 = arith.constant 0.000000e+00 : f32
      %105 = vector.broadcast %cst_64 : f32 to vector<1x1x128xf32>
      %106 = arith.cmpf ogt, %104, %105 : vector<1x1x128xf32>
      %cst_65 = arith.constant 1.000000e+00 : f32
      %cst_66 = arith.constant 0.000000e+00 : f32
      %107 = vector.broadcast %cst_65 : f32 to vector<1x1x128xf32>
      %108 = vector.broadcast %cst_66 : f32 to vector<1x1x128xf32>
      %109 = arith.select %106, %107, %108 : vector<1x1x128xi1>, vector<1x1x128xf32>
      %c0_67 = arith.constant 0 : index
      %110 = arith.index_cast %c5_i32 : i32 to index
      %c0_68 = arith.constant 0 : index
      %c0_69 = arith.constant 0 : index
      %111 = vector.load %arg5[%c0_67, %110, %c0_68, %c0_69] : memref<1x8x1x128xf32, #tpu.memory_space<vmem>>, vector<1x1x1x128xf32>
      %112 = vector.shape_cast %111 : vector<1x1x1x128xf32> to vector<1x1x128xf32>
      %113 = vector.shape_cast %109 : vector<1x1x128xf32> to vector<1x1x1x128xf32>
      tpu.vector_store %arg5[%c0_67, %110, %c0_68, %c0_69], %113 {strides = array<i32>} : memref<1x8x1x128xf32, #tpu.memory_space<vmem>>, vector<1x1x1x128xf32>,
      %c6_i32 = arith.constant 6 : i32
      %c0_70 = arith.constant 0 : index
      %114 = arith.index_cast %c6_i32 : i32 to index
      %c0_71 = arith.constant 0 : index
      %c0_72 = arith.constant 0 : index
      %115 = vector.load %arg4[%c0_70, %114, %c0_71, %c0_72] : memref<1x8x1x128xf32, #tpu.memory_space<vmem>>, vector<1x1x1x128xf32>
      %116 = vector.shape_cast %115 : vector<1x1x1x128xf32> to vector<1x1x128xf32>
      %cst_73 = arith.constant 0.899999976 : f32
      %117 = vector.broadcast %cst_73 : f32 to vector<1x1x128xf32>
      %118 = arith.mulf %117, %104 : vector<1x1x128xf32>
      %cst_74 = arith.constant 1.000000e-01 : f32
      %119 = vector.broadcast %cst_74 : f32 to vector<1x1x128xf32>
      %120 = arith.mulf %119, %116 : vector<1x1x128xf32>
      %121 = arith.addf %118, %120 : vector<1x1x128xf32>
      %122 = arith.mulf %109, %1 : vector<1x1x128xf32>
      %123 = arith.subf %121, %122 : vector<1x1x128xf32>
      %cst_75 = arith.constant 0.000000e+00 : f32
      %124 = vector.broadcast %cst_75 : f32 to vector<1x1x128xf32>
      %125 = arith.cmpf ogt, %123, %124 : vector<1x1x128xf32>
      %cst_76 = arith.constant 1.000000e+00 : f32
      %cst_77 = arith.constant 0.000000e+00 : f32
      %126 = vector.broadcast %cst_76 : f32 to vector<1x1x128xf32>
      %127 = vector.broadcast %cst_77 : f32 to vector<1x1x128xf32>
      %128 = arith.select %125, %126, %127 : vector<1x1x128xi1>, vector<1x1x128xf32>
      %c0_78 = arith.constant 0 : index
      %129 = arith.index_cast %c6_i32 : i32 to index
      %c0_79 = arith.constant 0 : index
      %c0_80 = arith.constant 0 : index
      %130 = vector.load %arg5[%c0_78, %129, %c0_79, %c0_80] : memref<1x8x1x128xf32, #tpu.memory_space<vmem>>, vector<1x1x1x128xf32>
      %131 = vector.shape_cast %130 : vector<1x1x1x128xf32> to vector<1x1x128xf32>
      %132 = vector.shape_cast %128 : vector<1x1x128xf32> to vector<1x1x1x128xf32>
      tpu.vector_store %arg5[%c0_78, %129, %c0_79, %c0_80], %132 {strides = array<i32>} : memref<1x8x1x128xf32, #tpu.memory_space<vmem>>, vector<1x1x1x128xf32>,
      %c7_i32 = arith.constant 7 : i32
      %c0_81 = arith.constant 0 : index
      %133 = arith.index_cast %c7_i32 : i32 to index
      %c0_82 = arith.constant 0 : index
      %c0_83 = arith.constant 0 : index
      %134 = vector.load %arg4[%c0_81, %133, %c0_82, %c0_83] : memref<1x8x1x128xf32, #tpu.memory_space<vmem>>, vector<1x1x1x128xf32>
      %135 = vector.shape_cast %134 : vector<1x1x1x128xf32> to vector<1x1x128xf32>
      %cst_84 = arith.constant 0.899999976 : f32
      %136 = vector.broadcast %cst_84 : f32 to vector<1x1x128xf32>
      %137 = arith.mulf %136, %123 : vector<1x1x128xf32>
      %cst_85 = arith.constant 1.000000e-01 : f32
      %138 = vector.broadcast %cst_85 : f32 to vector<1x1x128xf32>
      %139 = arith.mulf %138, %135 : vector<1x1x128xf32>
      %140 = arith.addf %137, %139 : vector<1x1x128xf32>
      %141 = arith.mulf %128, %1 : vector<1x1x128xf32>
      %142 = arith.subf %140, %141 : vector<1x1x128xf32>
      %cst_86 = arith.constant 0.000000e+00 : f32
      %143 = vector.broadcast %cst_86 : f32 to vector<1x1x128xf32>
      %144 = arith.cmpf ogt, %142, %143 : vector<1x1x128xf32>
      %cst_87 = arith.constant 1.000000e+00 : f32
      %cst_88 = arith.constant 0.000000e+00 : f32
      %145 = vector.broadcast %cst_87 : f32 to vector<1x1x128xf32>
      %146 = vector.broadcast %cst_88 : f32 to vector<1x1x128xf32>
      %147 = arith.select %144, %145, %146 : vector<1x1x128xi1>, vector<1x1x128xf32>
      %c0_89 = arith.constant 0 : index
      %148 = arith.index_cast %c7_i32 : i32 to index
      %c0_90 = arith.constant 0 : index
      %c0_91 = arith.constant 0 : index
      %149 = vector.load %arg5[%c0_89, %148, %c0_90, %c0_91] : memref<1x8x1x128xf32, #tpu.memory_space<vmem>>, vector<1x1x1x128xf32>
      %150 = vector.shape_cast %149 : vector<1x1x1x128xf32> to vector<1x1x128xf32>
      %151 = vector.shape_cast %147 : vector<1x1x128xf32> to vector<1x1x1x128xf32>
      tpu.vector_store %arg5[%c0_89, %148, %c0_90, %c0_91], %151 {strides = array<i32>} : memref<1x8x1x128xf32, #tpu.memory_space<vmem>>, vector<1x1x1x128xf32>,
      %c7_i32_92 = arith.constant 7 : i32
      %c0_93 = arith.constant 0 : index
      %c0_94 = arith.constant 0 : index
      %c0_95 = arith.constant 0 : index
      %152 = vector.load %arg6[%c0_93, %c0_94, %c0_95] : memref<1x1x128xf32, #tpu.memory_space<vmem>>, vector<1x1x128xf32>
      tpu.vector_store %arg6[%c0_93, %c0_94, %c0_95], %142 {strides = array<i32>} : memref<1x1x128xf32, #tpu.memory_space<vmem>>, vector<1x1x128xf32>,
      %c0_96 = arith.constant 0 : index
      %c0_97 = arith.constant 0 : index
      %c0_98 = arith.constant 0 : index
      %153 = vector.load %arg7[%c0_96, %c0_97, %c0_98] : memref<1x1x128xf32, #tpu.memory_space<vmem>>, vector<1x1x128xf32>
      tpu.vector_store %arg7[%c0_96, %c0_97, %c0_98], %147 {strides = array<i32>} : memref<1x1x128xf32, #tpu.memory_space<vmem>>, vector<1x1x128xf32>,
    } else {
    }
    %c0_i32_2 = arith.constant 0 : i32
    %5 = arith.cmpi sgt, %arg2, %c0_i32_2 : i32
    %6 = arith.extui %5 : i1 to i32
    %c0_i32_3 = arith.constant 0 : i32
    %7 = arith.cmpi ne, %6, %c0_i32_3 : i32
    scf.if %7 {
      %c0_4 = arith.constant 0 : index
      %c0_5 = arith.constant 0 : index
      %c0_6 = arith.constant 0 : index
      %8 = vector.load %arg6[%c0_4, %c0_5, %c0_6] : memref<1x1x128xf32, #tpu.memory_space<vmem>>, vector<1x1x128xf32>
      %c0_7 = arith.constant 0 : index
      %c0_8 = arith.constant 0 : index
      %c0_9 = arith.constant 0 : index
      %9 = vector.load %arg7[%c0_7, %c0_8, %c0_9] : memref<1x1x128xf32, #tpu.memory_space<vmem>>, vector<1x1x128xf32>
      %c0_i32_10 = arith.constant 0 : i32
      %c0_11 = arith.constant 0 : index
      %10 = arith.index_cast %c0_i32_10 : i32 to index
      %c0_12 = arith.constant 0 : index
      %c0_13 = arith.constant 0 : index
      %11 = vector.load %arg4[%c0_11, %10, %c0_12, %c0_13] : memref<1x8x1x128xf32, #tpu.memory_space<vmem>>, vector<1x1x1x128xf32>
      %12 = vector.shape_cast %11 : vector<1x1x1x128xf32> to vector<1x1x128xf32>
      %cst = arith.constant 0.899999976 : f32
      %13 = vector.broadcast %cst : f32 to vector<1x1x128xf32>
      %14 = arith.mulf %13, %8 : vector<1x1x128xf32>
      %cst_14 = arith.constant 1.000000e-01 : f32
      %15 = vector.broadcast %cst_14 : f32 to vector<1x1x128xf32>
      %16 = arith.mulf %15, %12 : vector<1x1x128xf32>
      %17 = arith.addf %14, %16 : vector<1x1x128xf32>
      %18 = arith.mulf %9, %1 : vector<1x1x128xf32>
      %19 = arith.subf %17, %18 : vector<1x1x128xf32>
      %cst_15 = arith.constant 0.000000e+00 : f32
      %20 = vector.broadcast %cst_15 : f32 to vector<1x1x128xf32>
      %21 = arith.cmpf ogt, %19, %20 : vector<1x1x128xf32>
      %cst_16 = arith.constant 1.000000e+00 : f32
      %cst_17 = arith.constant 0.000000e+00 : f32
      %22 = vector.broadcast %cst_16 : f32 to vector<1x1x128xf32>
      %23 = vector.broadcast %cst_17 : f32 to vector<1x1x128xf32>
      %24 = arith.select %21, %22, %23 : vector<1x1x128xi1>, vector<1x1x128xf32>
      %c0_18 = arith.constant 0 : index
      %25 = arith.index_cast %c0_i32_10 : i32 to index
      %c0_19 = arith.constant 0 : index
      %c0_20 = arith.constant 0 : index
      %26 = vector.load %arg5[%c0_18, %25, %c0_19, %c0_20] : memref<1x8x1x128xf32, #tpu.memory_space<vmem>>, vector<1x1x1x128xf32>
      %27 = vector.shape_cast %26 : vector<1x1x1x128xf32> to vector<1x1x128xf32>
      %28 = vector.shape_cast %24 : vector<1x1x128xf32> to vector<1x1x1x128xf32>
      tpu.vector_store %arg5[%c0_18, %25, %c0_19, %c0_20], %28 {strides = array<i32>} : memref<1x8x1x128xf32, #tpu.memory_space<vmem>>, vector<1x1x1x128xf32>,
      %c1_i32 = arith.constant 1 : i32
      %c0_21 = arith.constant 0 : index
      %29 = arith.index_cast %c1_i32 : i32 to index
      %c0_22 = arith.constant 0 : index
      %c0_23 = arith.constant 0 : index
      %30 = vector.load %arg4[%c0_21, %29, %c0_22, %c0_23] : memref<1x8x1x128xf32, #tpu.memory_space<vmem>>, vector<1x1x1x128xf32>
      %31 = vector.shape_cast %30 : vector<1x1x1x128xf32> to vector<1x1x128xf32>
      %cst_24 = arith.constant 0.899999976 : f32
      %32 = vector.broadcast %cst_24 : f32 to vector<1x1x128xf32>
      %33 = arith.mulf %32, %19 : vector<1x1x128xf32>
      %cst_25 = arith.constant 1.000000e-01 : f32
      %34 = vector.broadcast %cst_25 : f32 to vector<1x1x128xf32>
      %35 = arith.mulf %34, %31 : vector<1x1x128xf32>
      %36 = arith.addf %33, %35 : vector<1x1x128xf32>
      %37 = arith.mulf %24, %1 : vector<1x1x128xf32>
      %38 = arith.subf %36, %37 : vector<1x1x128xf32>
      %cst_26 = arith.constant 0.000000e+00 : f32
      %39 = vector.broadcast %cst_26 : f32 to vector<1x1x128xf32>
      %40 = arith.cmpf ogt, %38, %39 : vector<1x1x128xf32>
      %cst_27 = arith.constant 1.000000e+00 : f32
      %cst_28 = arith.constant 0.000000e+00 : f32
      %41 = vector.broadcast %cst_27 : f32 to vector<1x1x128xf32>
      %42 = vector.broadcast %cst_28 : f32 to vector<1x1x128xf32>
      %43 = arith.select %40, %41, %42 : vector<1x1x128xi1>, vector<1x1x128xf32>
      %c0_29 = arith.constant 0 : index
      %44 = arith.index_cast %c1_i32 : i32 to index
      %c0_30 = arith.constant 0 : index
      %c0_31 = arith.constant 0 : index
      %45 = vector.load %arg5[%c0_29, %44, %c0_30, %c0_31] : memref<1x8x1x128xf32, #tpu.memory_space<vmem>>, vector<1x1x1x128xf32>
      %46 = vector.shape_cast %45 : vector<1x1x1x128xf32> to vector<1x1x128xf32>
      %47 = vector.shape_cast %43 : vector<1x1x128xf32> to vector<1x1x1x128xf32>
      tpu.vector_store %arg5[%c0_29, %44, %c0_30, %c0_31], %47 {strides = array<i32>} : memref<1x8x1x128xf32, #tpu.memory_space<vmem>>, vector<1x1x1x128xf32>,
      %c2_i32 = arith.constant 2 : i32
      %c0_32 = arith.constant 0 : index
      %48 = arith.index_cast %c2_i32 : i32 to index
      %c0_33 = arith.constant 0 : index
      %c0_34 = arith.constant 0 : index
      %49 = vector.load %arg4[%c0_32, %48, %c0_33, %c0_34] : memref<1x8x1x128xf32, #tpu.memory_space<vmem>>, vector<1x1x1x128xf32>
      %50 = vector.shape_cast %49 : vector<1x1x1x128xf32> to vector<1x1x128xf32>
      %cst_35 = arith.constant 0.899999976 : f32
      %51 = vector.broadcast %cst_35 : f32 to vector<1x1x128xf32>
      %52 = arith.mulf %51, %38 : vector<1x1x128xf32>
      %cst_36 = arith.constant 1.000000e-01 : f32
      %53 = vector.broadcast %cst_36 : f32 to vector<1x1x128xf32>
      %54 = arith.mulf %53, %50 : vector<1x1x128xf32>
      %55 = arith.addf %52, %54 : vector<1x1x128xf32>
      %56 = arith.mulf %43, %1 : vector<1x1x128xf32>
      %57 = arith.subf %55, %56 : vector<1x1x128xf32>
      %cst_37 = arith.constant 0.000000e+00 : f32
      %58 = vector.broadcast %cst_37 : f32 to vector<1x1x128xf32>
      %59 = arith.cmpf ogt, %57, %58 : vector<1x1x128xf32>
      %cst_38 = arith.constant 1.000000e+00 : f32
      %cst_39 = arith.constant 0.000000e+00 : f32
      %60 = vector.broadcast %cst_38 : f32 to vector<1x1x128xf32>
      %61 = vector.broadcast %cst_39 : f32 to vector<1x1x128xf32>
      %62 = arith.select %59, %60, %61 : vector<1x1x128xi1>, vector<1x1x128xf32>
      %c0_40 = arith.constant 0 : index
      %63 = arith.index_cast %c2_i32 : i32 to index
      %c0_41 = arith.constant 0 : index
      %c0_42 = arith.constant 0 : index
      %64 = vector.load %arg5[%c0_40, %63, %c0_41, %c0_42] : memref<1x8x1x128xf32, #tpu.memory_space<vmem>>, vector<1x1x1x128xf32>
      %65 = vector.shape_cast %64 : vector<1x1x1x128xf32> to vector<1x1x128xf32>
      %66 = vector.shape_cast %62 : vector<1x1x128xf32> to vector<1x1x1x128xf32>
      tpu.vector_store %arg5[%c0_40, %63, %c0_41, %c0_42], %66 {strides = array<i32>} : memref<1x8x1x128xf32, #tpu.memory_space<vmem>>, vector<1x1x1x128xf32>,
      %c3_i32 = arith.constant 3 : i32
      %c0_43 = arith.constant 0 : index
      %67 = arith.index_cast %c3_i32 : i32 to index
      %c0_44 = arith.constant 0 : index
      %c0_45 = arith.constant 0 : index
      %68 = vector.load %arg4[%c0_43, %67, %c0_44, %c0_45] : memref<1x8x1x128xf32, #tpu.memory_space<vmem>>, vector<1x1x1x128xf32>
      %69 = vector.shape_cast %68 : vector<1x1x1x128xf32> to vector<1x1x128xf32>
      %cst_46 = arith.constant 0.899999976 : f32
      %70 = vector.broadcast %cst_46 : f32 to vector<1x1x128xf32>
      %71 = arith.mulf %70, %57 : vector<1x1x128xf32>
      %cst_47 = arith.constant 1.000000e-01 : f32
      %72 = vector.broadcast %cst_47 : f32 to vector<1x1x128xf32>
      %73 = arith.mulf %72, %69 : vector<1x1x128xf32>
      %74 = arith.addf %71, %73 : vector<1x1x128xf32>
      %75 = arith.mulf %62, %1 : vector<1x1x128xf32>
      %76 = arith.subf %74, %75 : vector<1x1x128xf32>
      %cst_48 = arith.constant 0.000000e+00 : f32
      %77 = vector.broadcast %cst_48 : f32 to vector<1x1x128xf32>
      %78 = arith.cmpf ogt, %76, %77 : vector<1x1x128xf32>
      %cst_49 = arith.constant 1.000000e+00 : f32
      %cst_50 = arith.constant 0.000000e+00 : f32
      %79 = vector.broadcast %cst_49 : f32 to vector<1x1x128xf32>
      %80 = vector.broadcast %cst_50 : f32 to vector<1x1x128xf32>
      %81 = arith.select %78, %79, %80 : vector<1x1x128xi1>, vector<1x1x128xf32>
      %c0_51 = arith.constant 0 : index
      %82 = arith.index_cast %c3_i32 : i32 to index
      %c0_52 = arith.constant 0 : index
      %c0_53 = arith.constant 0 : index
      %83 = vector.load %arg5[%c0_51, %82, %c0_52, %c0_53] : memref<1x8x1x128xf32, #tpu.memory_space<vmem>>, vector<1x1x1x128xf32>
      %84 = vector.shape_cast %83 : vector<1x1x1x128xf32> to vector<1x1x128xf32>
      %85 = vector.shape_cast %81 : vector<1x1x128xf32> to vector<1x1x1x128xf32>
      tpu.vector_store %arg5[%c0_51, %82, %c0_52, %c0_53], %85 {strides = array<i32>} : memref<1x8x1x128xf32, #tpu.memory_space<vmem>>, vector<1x1x1x128xf32>,
      %c4_i32 = arith.constant 4 : i32
      %c0_54 = arith.constant 0 : index
      %86 = arith.index_cast %c4_i32 : i32 to index
      %c0_55 = arith.constant 0 : index
      %c0_56 = arith.constant 0 : index
      %87 = vector.load %arg4[%c0_54, %86, %c0_55, %c0_56] : memref<1x8x1x128xf32, #tpu.memory_space<vmem>>, vector<1x1x1x128xf32>
      %88 = vector.shape_cast %87 : vector<1x1x1x128xf32> to vector<1x1x128xf32>
      %cst_57 = arith.constant 0.899999976 : f32
      %89 = vector.broadcast %cst_57 : f32 to vector<1x1x128xf32>
      %90 = arith.mulf %89, %76 : vector<1x1x128xf32>
      %cst_58 = arith.constant 1.000000e-01 : f32
      %91 = vector.broadcast %cst_58 : f32 to vector<1x1x128xf32>
      %92 = arith.mulf %91, %88 : vector<1x1x128xf32>
      %93 = arith.addf %90, %92 : vector<1x1x128xf32>
      %94 = arith.mulf %81, %1 : vector<1x1x128xf32>
      %95 = arith.subf %93, %94 : vector<1x1x128xf32>
      %cst_59 = arith.constant 0.000000e+00 : f32
      %96 = vector.broadcast %cst_59 : f32 to vector<1x1x128xf32>
      %97 = arith.cmpf ogt, %95, %96 : vector<1x1x128xf32>
      %cst_60 = arith.constant 1.000000e+00 : f32
      %cst_61 = arith.constant 0.000000e+00 : f32
      %98 = vector.broadcast %cst_60 : f32 to vector<1x1x128xf32>
      %99 = vector.broadcast %cst_61 : f32 to vector<1x1x128xf32>
      %100 = arith.select %97, %98, %99 : vector<1x1x128xi1>, vector<1x1x128xf32>
      %c0_62 = arith.constant 0 : index
      %101 = arith.index_cast %c4_i32 : i32 to index
      %c0_63 = arith.constant 0 : index
      %c0_64 = arith.constant 0 : index
      %102 = vector.load %arg5[%c0_62, %101, %c0_63, %c0_64] : memref<1x8x1x128xf32, #tpu.memory_space<vmem>>, vector<1x1x1x128xf32>
      %103 = vector.shape_cast %102 : vector<1x1x1x128xf32> to vector<1x1x128xf32>
      %104 = vector.shape_cast %100 : vector<1x1x128xf32> to vector<1x1x1x128xf32>
      tpu.vector_store %arg5[%c0_62, %101, %c0_63, %c0_64], %104 {strides = array<i32>} : memref<1x8x1x128xf32, #tpu.memory_space<vmem>>, vector<1x1x1x128xf32>,
      %c5_i32 = arith.constant 5 : i32
      %c0_65 = arith.constant 0 : index
      %105 = arith.index_cast %c5_i32 : i32 to index
      %c0_66 = arith.constant 0 : index
      %c0_67 = arith.constant 0 : index
      %106 = vector.load %arg4[%c0_65, %105, %c0_66, %c0_67] : memref<1x8x1x128xf32, #tpu.memory_space<vmem>>, vector<1x1x1x128xf32>
      %107 = vector.shape_cast %106 : vector<1x1x1x128xf32> to vector<1x1x128xf32>
      %cst_68 = arith.constant 0.899999976 : f32
      %108 = vector.broadcast %cst_68 : f32 to vector<1x1x128xf32>
      %109 = arith.mulf %108, %95 : vector<1x1x128xf32>
      %cst_69 = arith.constant 1.000000e-01 : f32
      %110 = vector.broadcast %cst_69 : f32 to vector<1x1x128xf32>
      %111 = arith.mulf %110, %107 : vector<1x1x128xf32>
      %112 = arith.addf %109, %111 : vector<1x1x128xf32>
      %113 = arith.mulf %100, %1 : vector<1x1x128xf32>
      %114 = arith.subf %112, %113 : vector<1x1x128xf32>
      %cst_70 = arith.constant 0.000000e+00 : f32
      %115 = vector.broadcast %cst_70 : f32 to vector<1x1x128xf32>
      %116 = arith.cmpf ogt, %114, %115 : vector<1x1x128xf32>
      %cst_71 = arith.constant 1.000000e+00 : f32
      %cst_72 = arith.constant 0.000000e+00 : f32
      %117 = vector.broadcast %cst_71 : f32 to vector<1x1x128xf32>
      %118 = vector.broadcast %cst_72 : f32 to vector<1x1x128xf32>
      %119 = arith.select %116, %117, %118 : vector<1x1x128xi1>, vector<1x1x128xf32>
      %c0_73 = arith.constant 0 : index
      %120 = arith.index_cast %c5_i32 : i32 to index
      %c0_74 = arith.constant 0 : index
      %c0_75 = arith.constant 0 : index
      %121 = vector.load %arg5[%c0_73, %120, %c0_74, %c0_75] : memref<1x8x1x128xf32, #tpu.memory_space<vmem>>, vector<1x1x1x128xf32>
      %122 = vector.shape_cast %121 : vector<1x1x1x128xf32> to vector<1x1x128xf32>
      %123 = vector.shape_cast %119 : vector<1x1x128xf32> to vector<1x1x1x128xf32>
      tpu.vector_store %arg5[%c0_73, %120, %c0_74, %c0_75], %123 {strides = array<i32>} : memref<1x8x1x128xf32, #tpu.memory_space<vmem>>, vector<1x1x1x128xf32>,
      %c6_i32 = arith.constant 6 : i32
      %c0_76 = arith.constant 0 : index
      %124 = arith.index_cast %c6_i32 : i32 to index
      %c0_77 = arith.constant 0 : index
      %c0_78 = arith.constant 0 : index
      %125 = vector.load %arg4[%c0_76, %124, %c0_77, %c0_78] : memref<1x8x1x128xf32, #tpu.memory_space<vmem>>, vector<1x1x1x128xf32>
      %126 = vector.shape_cast %125 : vector<1x1x1x128xf32> to vector<1x1x128xf32>
      %cst_79 = arith.constant 0.899999976 : f32
      %127 = vector.broadcast %cst_79 : f32 to vector<1x1x128xf32>
      %128 = arith.mulf %127, %114 : vector<1x1x128xf32>
      %cst_80 = arith.constant 1.000000e-01 : f32
      %129 = vector.broadcast %cst_80 : f32 to vector<1x1x128xf32>
      %130 = arith.mulf %129, %126 : vector<1x1x128xf32>
      %131 = arith.addf %128, %130 : vector<1x1x128xf32>
      %132 = arith.mulf %119, %1 : vector<1x1x128xf32>
      %133 = arith.subf %131, %132 : vector<1x1x128xf32>
      %cst_81 = arith.constant 0.000000e+00 : f32
      %134 = vector.broadcast %cst_81 : f32 to vector<1x1x128xf32>
      %135 = arith.cmpf ogt, %133, %134 : vector<1x1x128xf32>
      %cst_82 = arith.constant 1.000000e+00 : f32
      %cst_83 = arith.constant 0.000000e+00 : f32
      %136 = vector.broadcast %cst_82 : f32 to vector<1x1x128xf32>
      %137 = vector.broadcast %cst_83 : f32 to vector<1x1x128xf32>
      %138 = arith.select %135, %136, %137 : vector<1x1x128xi1>, vector<1x1x128xf32>
      %c0_84 = arith.constant 0 : index
      %139 = arith.index_cast %c6_i32 : i32 to index
      %c0_85 = arith.constant 0 : index
      %c0_86 = arith.constant 0 : index
      %140 = vector.load %arg5[%c0_84, %139, %c0_85, %c0_86] : memref<1x8x1x128xf32, #tpu.memory_space<vmem>>, vector<1x1x1x128xf32>
      %141 = vector.shape_cast %140 : vector<1x1x1x128xf32> to vector<1x1x128xf32>
      %142 = vector.shape_cast %138 : vector<1x1x128xf32> to vector<1x1x1x128xf32>
      tpu.vector_store %arg5[%c0_84, %139, %c0_85, %c0_86], %142 {strides = array<i32>} : memref<1x8x1x128xf32, #tpu.memory_space<vmem>>, vector<1x1x1x128xf32>,
      %c7_i32 = arith.constant 7 : i32
      %c0_87 = arith.constant 0 : index
      %143 = arith.index_cast %c7_i32 : i32 to index
      %c0_88 = arith.constant 0 : index
      %c0_89 = arith.constant 0 : index
      %144 = vector.load %arg4[%c0_87, %143, %c0_88, %c0_89] : memref<1x8x1x128xf32, #tpu.memory_space<vmem>>, vector<1x1x1x128xf32>
      %145 = vector.shape_cast %144 : vector<1x1x1x128xf32> to vector<1x1x128xf32>
      %cst_90 = arith.constant 0.899999976 : f32
      %146 = vector.broadcast %cst_90 : f32 to vector<1x1x128xf32>
      %147 = arith.mulf %146, %133 : vector<1x1x128xf32>
      %cst_91 = arith.constant 1.000000e-01 : f32
      %148 = vector.broadcast %cst_91 : f32 to vector<1x1x128xf32>
      %149 = arith.mulf %148, %145 : vector<1x1x128xf32>
      %150 = arith.addf %147, %149 : vector<1x1x128xf32>
      %151 = arith.mulf %138, %1 : vector<1x1x128xf32>
      %152 = arith.subf %150, %151 : vector<1x1x128xf32>
      %cst_92 = arith.constant 0.000000e+00 : f32
      %153 = vector.broadcast %cst_92 : f32 to vector<1x1x128xf32>
      %154 = arith.cmpf ogt, %152, %153 : vector<1x1x128xf32>
      %cst_93 = arith.constant 1.000000e+00 : f32
      %cst_94 = arith.constant 0.000000e+00 : f32
      %155 = vector.broadcast %cst_93 : f32 to vector<1x1x128xf32>
      %156 = vector.broadcast %cst_94 : f32 to vector<1x1x128xf32>
      %157 = arith.select %154, %155, %156 : vector<1x1x128xi1>, vector<1x1x128xf32>
      %c0_95 = arith.constant 0 : index
      %158 = arith.index_cast %c7_i32 : i32 to index
      %c0_96 = arith.constant 0 : index
      %c0_97 = arith.constant 0 : index
      %159 = vector.load %arg5[%c0_95, %158, %c0_96, %c0_97] : memref<1x8x1x128xf32, #tpu.memory_space<vmem>>, vector<1x1x1x128xf32>
      %160 = vector.shape_cast %159 : vector<1x1x1x128xf32> to vector<1x1x128xf32>
      %161 = vector.shape_cast %157 : vector<1x1x128xf32> to vector<1x1x1x128xf32>
      tpu.vector_store %arg5[%c0_95, %158, %c0_96, %c0_97], %161 {strides = array<i32>} : memref<1x8x1x128xf32, #tpu.memory_space<vmem>>, vector<1x1x1x128xf32>,
      %c8_i32 = arith.constant 8 : i32
      %c0_98 = arith.constant 0 : index
      %c0_99 = arith.constant 0 : index
      %c0_100 = arith.constant 0 : index
      %162 = vector.load %arg6[%c0_98, %c0_99, %c0_100] : memref<1x1x128xf32, #tpu.memory_space<vmem>>, vector<1x1x128xf32>
      tpu.vector_store %arg6[%c0_98, %c0_99, %c0_100], %152 {strides = array<i32>} : memref<1x1x128xf32, #tpu.memory_space<vmem>>, vector<1x1x128xf32>,
      %c0_101 = arith.constant 0 : index
      %c0_102 = arith.constant 0 : index
      %c0_103 = arith.constant 0 : index
      %163 = vector.load %arg7[%c0_101, %c0_102, %c0_103] : memref<1x1x128xf32, #tpu.memory_space<vmem>>, vector<1x1x128xf32>
      tpu.vector_store %arg7[%c0_101, %c0_102, %c0_103], %157 {strides = array<i32>} : memref<1x1x128xf32, #tpu.memory_space<vmem>>, vector<1x1x128xf32>,
    } else {
    }
    return
  }
  func.func @transform_0(%arg0: i32, %arg1: i32, %arg2: i32) -> (i32, i32) {
    %c0_i32 = arith.constant 0 : i32
    %c0_i32_0 = arith.constant 0 : i32
    return %arg1, %c0_i32 : i32, i32
  }
  func.func @transform_1(%arg0: i32, %arg1: i32, %arg2: i32) -> (i32, i32, i32, i32) {
    %c0_i32 = arith.constant 0 : i32
    %c0_i32_0 = arith.constant 0 : i32
    return %arg0, %arg2, %arg1, %c0_i32 : i32, i32, i32, i32
  }
  func.func @transform_2(%arg0: i32, %arg1: i32, %arg2: i32) -> (i32, i32, i32, i32) {
    %c0_i32 = arith.constant 0 : i32
    %c0_i32_0 = arith.constant 0 : i32
    return %arg0, %arg2, %arg1, %c0_i32 : i32, i32, i32, i32
  }
}

</mosaic_0001>

<llo_original>
// kernel: tpu_custom_call.1
$region0: #{tpu_custom_call.1}
  #allocation0 [shape = 'u32[]', space=smem, size = 0x4, offset = 0x4, fixed_abs, tag = 'smem constant byte address 0x4 - core index']
  #allocation1 [shape = 'u32[144,128]{1,0:T(1,128)}', space=vmem, size = 0x12000, scoped, tag = 'internal scratch']
  #allocation2 [shape = 'f32[1,1,128]{2,1,0:T(1,128)}', space=vmem, size = 0x200, scoped, tag = 'scratch operand']
  #allocation3 [shape = 'f32[1,1,128]{2,1,0:T(1,128)}', space=vmem, size = 0x200, scoped, tag = 'scratch operand']
  %s0 = inlined_call_operand.hbm [shape: f32[1,128], index: 0, kind: input, shape index: {}]
  %s1 = inlined_call_operand.hbm [shape: f32[2,8,1,128], index: 1, kind: input, shape index: {}]
  %s2 = inlined_call_operand.hbm [shape: f32[2,8,1,128], index: 2, kind: output, shape index: {}]
  %s3 = sld [smem:[#allocation0]]
  $region57: #{tpu_custom_call.1} parent=0
    _
  %s5 = ssub.s32 1, %s3
  %s6 = scalar_select 0, %s5, %s3
  $region1: #{tpu_custom_call.1} parent=0
    #allocation4 [shape = 'u8[512]{0}', space=vmem, size = 0x400, scoped, tag = 'input window, operand 0, single buffered']
    #allocation5 [shape = 's32[2]{0}', space=sflag, size = 0x8, scoped, tag = 'scoped memory for tpu_custom_call.1']
    #allocation6 [shape = 's32[2]{0}', space=sflag, size = 0x8, scoped, tag = 'scoped memory for tpu_custom_call.1']
    #allocation7 [shape = 'u8[8192]{0}', space=vmem, size = 0x2000, scoped, tag = 'input window, operand 1']
    #allocation8 [shape = 's32[2]{0}', space=sflag, size = 0x8, scoped, tag = 'scoped memory for tpu_custom_call.1']
    #allocation9 [shape = 'u8[8192]{0}', space=vmem, size = 0x2000, scoped, tag = 'output window, operand 0']
    %7 = vsyncpa [#allocation5], 0
    %8 = vsyncpa [#allocation8], 0
    %s9 = scalar_lea.sflag [#allocation8], 1
    %10 = vsyncpa %s9, 0
    %11 = vsyncpa [#allocation6], 0
    %s12 = scalar_lea.sflag [#allocation6], 1
    %13 = vsyncpa %s12, 0
    loop: start=0, step=1, limit=4
    $region2: #{tpu_custom_call.1} parent=1 // loop_pre_header
      _
    $region3: #{tpu_custom_call.1} parent=1 // loop_header
      %s15 = sphi 0, %s19
      %p16 = scmp.ge.s32.totalorder %s15, 4
      %s22 = sphi 0, %s41
      %s23 = sphi 0, %s37
      %s24 = sphi 0, %s33
      %s25 = sphi 0, %s22
      %s26 = sphi 0, %s23
      %s27 = sphi 0, %s24
      %s28 = sphi 0, %s25
      %s29 = sphi 0, %s26
      %s30 = sphi 0, %s27
      %s44 = sphi 0, %s46
      %s47 = sphi 0, %s44
      %s48 = sphi 0, %s47
      %s64 = sphi 0, %s48
      %s74 = sphi 0, %s76
      %s77 = sphi 0, %s74
      %s78 = sphi 0, %s77
      %s94 = sphi 0, %s78
      %s104 = sphi 0, %s106
      %s107 = sphi 0, %s104
      %s108 = sphi 0, %s107
      %s124 = sphi 0, %s108
    $region4: #{tpu_custom_call.1} parent=1 // loop_header_branch
      %18 = sbr.rel (%p16) target = $region8
    $region5: #{tpu_custom_call.1} parent=1 // loop_body
      %s20 = ssub.s32 %s15, 1
      %s21 = ssub.s32 %s15, 2
      %s31 = sadd.s32 1, %s24
      %p32 = scmp.ge.s32.totalorder %s31, 1
      %s33 = scalar_select %p32, 0, %s31
      %s34 = sadd.s32 1, %s23
      %s35 = scalar_select %p32, %s34, %s23
      %p36 = scmp.ge.s32.totalorder %s35, 1
      %s37 = scalar_select %p36, 0, %s35
      %s38 = sadd.s32 1, %s22
      %s39 = scalar_select %p36, %s38, %s22
      %p40 = scmp.ge.s32.totalorder %s39, 2
      %s41 = scalar_select %p40, 0, %s39
      %s42 = ssub.s32 %s23, %s37
      %p43 = scmp.eq.s32.totalorder %s42, 0
      %s45 = sadd.s32 %s44, 1
      %s46 = scalar_select %p43, %s44, %s45
      %p49 = pneg %p43
      %p50 = scmp.eq.s32.totalorder %s15, 1
      %p51 = por %p49, %p50
      %p52 = scmp.ne.s32.totalorder %s44, %s47
      %p53 = scmp.eq.s32.totalorder %s15, 0
      %p54 = por %p52, %p53
      %p55 = scmp.ne.s32.totalorder %s44, %s47
      %p56 = scmp.eq.s32.totalorder %s20, 1
      %p57 = por %p55, %p56
      %p58 = scmp.ne.s32.totalorder %s47, %s48
      %p59 = scmp.eq.s32.totalorder %s20, 0
      %p60 = por %p58, %p59
      %p61 = scmp.ne.s32.totalorder %s47, %s48
      %p62 = scmp.eq.s32.totalorder %s21, 1
      %p63 = por %p61, %p62
      %p65 = scmp.ne.s32.totalorder %s48, %s64
      %p66 = scmp.eq.s32.totalorder %s21, 0
      %p67 = por %p65, %p66
      %s68 = ssub.s32 %s22, %s41
      %s69 = ssub.s32 %s24, %s33
      %s70 = sor.u32 %s68, %s69
      %s71 = ssub.s32 %s23, %s37
      %s72 = sor.u32 %s70, %s71
      %p73 = scmp.eq.s32.totalorder %s72, 0
      %s75 = sadd.s32 %s74, 1
      %s76 = scalar_select %p73, %s74, %s75
      %p79 = pneg %p73
      %p80 = scmp.eq.s32.totalorder %s15, 1
      %p81 = por %p79, %p80
      %p82 = scmp.ne.s32.totalorder %s74, %s77
      %p83 = scmp.eq.s32.totalorder %s15, 0
      %p84 = por %p82, %p83
      %p85 = scmp.ne.s32.totalorder %s74, %s77
      %p86 = scmp.eq.s32.totalorder %s20, 1
      %p87 = por %p85, %p86
      %p88 = scmp.ne.s32.totalorder %s77, %s78
      %p89 = scmp.eq.s32.totalorder %s20, 0
      %p90 = por %p88, %p89
      %p91 = scmp.ne.s32.totalorder %s77, %s78
      %p92 = scmp.eq.s32.totalorder %s21, 1
      %p93 = por %p91, %p92
      %p95 = scmp.ne.s32.totalorder %s78, %s94
      %p96 = scmp.eq.s32.totalorder %s21, 0
      %p97 = por %p95, %p96
      %s98 = ssub.s32 %s22, %s41
      %s99 = ssub.s32 %s24, %s33
      %s100 = sor.u32 %s98, %s99
      %s101 = ssub.s32 %s23, %s37
      %s102 = sor.u32 %s100, %s101
      %p103 = scmp.eq.s32.totalorder %s102, 0
      %s105 = sadd.s32 %s104, 1
      %s106 = scalar_select %p103, %s104, %s105
      %p109 = pneg %p103
      %p110 = scmp.eq.s32.totalorder %s15, 1
      %p111 = por %p109, %p110
      %p112 = scmp.ne.s32.totalorder %s104, %s107
      %p113 = scmp.eq.s32.totalorder %s15, 0
      %p114 = por %p112, %p113
      %p115 = scmp.ne.s32.totalorder %s104, %s107
      %p116 = scmp.eq.s32.totalorder %s20, 1
      %p117 = por %p115, %p116
      %p118 = scmp.ne.s32.totalorder %s107, %s108
      %p119 = scmp.eq.s32.totalorder %s20, 0
      %p120 = por %p118, %p119
      %p121 = scmp.ne.s32.totalorder %s107, %s108
      %p122 = scmp.eq.s32.totalorder %s21, 1
      %p123 = por %p121, %p122
      %p125 = scmp.ne.s32.totalorder %s108, %s124
      %p126 = scmp.eq.s32.totalorder %s21, 0
      %p127 = por %p125, %p126
      %p128 = scmp.le.s32.totalorder 1, %s15
      %p129 = scmp.lt.s32.totalorder %s15, 3
      %p130 = pnand %p128, %p129
      %p131 = pneg %p130
      // Predicated region
      $region9: #{tpu_custom_call.1} parent=5 // pred_check
        _
      $region10: #{tpu_custom_call.1} parent=5 // pred_check_branch
        %133 = sbr.rel (%p130) target = $region12
      $region11: #{tpu_custom_call.1} parent=5 // pred_region
        %s134 = ssub.s32 %s15, 1
        // Predicated region
        $region13: #{tpu_custom_call.1} parent=11 // pred_check
          %p135 = pneg %p60
        $region14: #{tpu_custom_call.1} parent=11 // pred_check_branch
          %137 = sbr.rel (%p135) target = $region16
        $region15: #{tpu_custom_call.1} parent=11 // pred_region
          %s139 = ssub.s32 16, 16
          %140 = vsyncadd [#allocation5], %s139
          %s141 = smul.addr %s26, 16
          %s142 = scalar_lea.hbm %s0, %s141
          %s144 = sshll.u32 [#allocation4], 4
          %s145 = int_to_ptr.vmem [resolvable:$true] %s144
          %147 = dma.hbm_to_vmem [thread:$0]  %s142, 16, %s145, [#allocation5]
        $region16: #{tpu_custom_call.1} parent=11 // pred_fallthru
          _
      $region12: #{tpu_custom_call.1} parent=5 // pred_fallthru
        _
      %p148 = scmp.lt.s32.totalorder %s15, 2
      // Predicated region
      $region17: #{tpu_custom_call.1} parent=5 // pred_check
        %p149 = pneg %p148
      $region18: #{tpu_custom_call.1} parent=5 // pred_check_branch
        %151 = sbr.rel (%p149) target = $region20
      $region19: #{tpu_custom_call.1} parent=5 // pred_region
        // Predicated region
        $region21: #{tpu_custom_call.1} parent=19 // pred_check
          %p152 = pneg %p84
        $region22: #{tpu_custom_call.1} parent=19 // pred_check_branch
          %154 = sbr.rel (%p152) target = $region24
        $region23: #{tpu_custom_call.1} parent=19 // pred_region
          %s155 = sand.u32 %s74, 1
          %s156 = scalar_lea.sflag [#allocation8], %s155
          %s157 = sand.u32 %s74, 1
          %s158 = smul.addr %s157, 8
          %s159 = scalar_lea.vmem [#allocation7], %s158
          %s160 = smul.u32 8, %s24
          %s162 = ssub.s32 128, 128
          %163 = vsyncadd %s156, %s162
          %s164 = sadd.s32 %s23, %s160
          %s165 = smul.addr %s22, 8
          %s166 = sadd.s32 %s164, %s165
          %s167 = smul.addr %s166, 16
          %s168 = scalar_lea.hbm %s1, %s167
          %s169 = sshll.u32 %s159, 4
          %s170 = int_to_ptr.vmem [resolvable:$true] %s169
          %175 = dma.hbm_to_vmem [thread:$0]  %s168, 128, %s170, %s156, 16, 16, 1
        $region24: #{tpu_custom_call.1} parent=19 // pred_fallthru
          _
      $region20: #{tpu_custom_call.1} parent=5 // pred_fallthru
        _
      %p176 = scmp.le.s32.totalorder 1, %s15
      %p177 = scmp.lt.s32.totalorder %s15, 3
      %p178 = pnand %p176, %p177
      %p179 = pneg %p178
      // Predicated region
      $region25: #{tpu_custom_call.1} parent=5 // pred_check
        _
      $region26: #{tpu_custom_call.1} parent=5 // pred_check_branch
        %181 = sbr.rel (%p178) target = $region28
      $region27: #{tpu_custom_call.1} parent=5 // pred_region
        %s182 = ssub.s32 %s15, 1
        // Predicated region
        $region29: #{tpu_custom_call.1} parent=27 // pred_check
          %p183 = pneg %p60
        $region30: #{tpu_custom_call.1} parent=27 // pred_check_branch
          %185 = sbr.rel (%p183) target = $region32
        $region31: #{tpu_custom_call.1} parent=27 // pred_region
          %186 = dma.done [#allocation5], 16
        $region32: #{tpu_custom_call.1} parent=27 // pred_fallthru
          _
        %s187 = sand.u32 %s77, 1
        %s188 = scalar_lea.sflag [#allocation8], %s187
        %s189 = sand.u32 %s77, 1
        %s190 = smul.addr %s189, 8
        %s191 = scalar_lea.vmem [#allocation7], %s190
        // Predicated region
        $region33: #{tpu_custom_call.1} parent=27 // pred_check
          %p192 = pneg %p90
        $region34: #{tpu_custom_call.1} parent=27 // pred_check_branch
          %194 = sbr.rel (%p192) target = $region36
        $region35: #{tpu_custom_call.1} parent=27 // pred_region
          %195 = dma.done %s188, 128
        $region36: #{tpu_custom_call.1} parent=27 // pred_fallthru
          _
        %p196 = pneg %p60
        %p197 = pneg %p57
        %s198 = sand.u32 %s77, 1
        %s199 = scalar_lea.sflag [#allocation8], %s198
        %s200 = sand.u32 %s77, 1
        %s201 = smul.addr %s200, 8
        %s202 = scalar_lea.vmem [#allocation7], %s201
        %p203 = pneg %p90
        %p204 = pneg %p87
        %p205 = pneg %p120
        %p206 = pneg %p117
        %s207 = sand.u32 %s107, 1
        %s208 = scalar_lea.sflag [#allocation6], %s207
        %s209 = sand.u32 %s107, 1
        %s210 = smul.addr %s209, 8
        %s211 = scalar_lea.vmem [#allocation9], %s210
        %s212 = smul.u32 8, %s27
        %s213 = smul.u32 8, %s27
        %v214 = vld [vmem:[#allocation4] sm:$0x1]
        %p215 = scmp.eq.s32.totalorder %s27, 0
        // Predicated region
        $region37: #{tpu_custom_call.1} parent=27 // pred_check
          %p216 = pneg %p215
        $region38: #{tpu_custom_call.1} parent=27 // pred_check_branch
          %218 = sbr.rel (%p216) target = $region40
        $region39: #{tpu_custom_call.1} parent=27 // pred_region
          %v219 = vld [vmem:[%s191] sm:$0x1]
          %vm220 = vcmp.gt.f32.partialorder %v219, 0.0
          %v221 = vsel %vm220, 1.0, 0.0
          %222 = vst [vmem:[%s211] sm:$0x1] %v221
          %s223 = scalar_lea.vmem %s191, 1 [#allocation7]
          %v224 = vld [vmem:[%s223] sm:$0x1]
          %v225 = vmul.f32 %v224, 0.1
          %v226 = vadd.f32 %v225, 0.0
          %v227 = vmul.f32 %v221, %v214
          %v228 = vsub.f32 %v226, %v227
          %vm229 = vcmp.gt.f32.partialorder %v228, 0.0
          %v230 = vsel %vm229, 1.0, 0.0
          %s231 = scalar_lea.vmem %s211, 1 [#allocation9]
          %232 = vst [vmem:[%s231] sm:$0x1] %v230
          %s233 = scalar_lea.vmem %s191, 2 [#allocation7]
          %v234 = vld [vmem:[%s233] sm:$0x1]
          %v235 = vmul.f32 %v228, 0.9
          %v236 = vmul.f32 %v234, 0.1
          %v237 = vadd.f32 %v235, %v236
          %v238 = vmul.f32 %v230, %v214
          %v239 = vsub.f32 %v237, %v238
          %vm240 = vcmp.gt.f32.partialorder %v239, 0.0
          %v241 = vsel %vm240, 1.0, 0.0
          %s242 = scalar_lea.vmem %s211, 2 [#allocation9]
          %243 = vst [vmem:[%s242] sm:$0x1] %v241
          %s244 = scalar_lea.vmem %s191, 3 [#allocation7]
          %v245 = vld [vmem:[%s244] sm:$0x1]
          %v246 = vmul.f32 %v239, 0.9
          %v247 = vmul.f32 %v245, 0.1
          %v248 = vadd.f32 %v246, %v247
          %v249 = vmul.f32 %v241, %v214
          %v250 = vsub.f32 %v248, %v249
          %vm251 = vcmp.gt.f32.partialorder %v250, 0.0
          %v252 = vsel %vm251, 1.0, 0.0
          %s253 = scalar_lea.vmem %s211, 3 [#allocation9]
          %254 = vst [vmem:[%s253] sm:$0x1] %v252
          %s255 = scalar_lea.vmem %s191, 4 [#allocation7]
          %v256 = vld [vmem:[%s255] sm:$0x1]
          %v257 = vmul.f32 %v250, 0.9
          %v258 = vmul.f32 %v256, 0.1
          %v259 = vadd.f32 %v257, %v258
          %v260 = vmul.f32 %v252, %v214
          %v261 = vsub.f32 %v259, %v260
          %vm262 = vcmp.gt.f32.partialorder %v261, 0.0
          %v263 = vsel %vm262, 1.0, 0.0
          %s264 = scalar_lea.vmem %s211, 4 [#allocation9]
          %265 = vst [vmem:[%s264] sm:$0x1] %v263
          %s266 = scalar_lea.vmem %s191, 5 [#allocation7]
          %v267 = vld [vmem:[%s266] sm:$0x1]
          %v268 = vmul.f32 %v261, 0.9
          %v269 = vmul.f32 %v267, 0.1
          %v270 = vadd.f32 %v268, %v269
          %v271 = vmul.f32 %v263, %v214
          %v272 = vsub.f32 %v270, %v271
          %vm273 = vcmp.gt.f32.partialorder %v272, 0.0
          %v274 = vsel %vm273, 1.0, 0.0
          %s275 = scalar_lea.vmem %s211, 5 [#allocation9]
          %276 = vst [vmem:[%s275] sm:$0x1] %v274
          %s277 = scalar_lea.vmem %s191, 6 [#allocation7]
          %v278 = vld [vmem:[%s277] sm:$0x1]
          %v279 = vmul.f32 %v272, 0.9
          %v280 = vmul.f32 %v278, 0.1
          %v281 = vadd.f32 %v279, %v280
          %v282 = vmul.f32 %v274, %v214
          %v283 = vsub.f32 %v281, %v282
          %vm284 = vcmp.gt.f32.partialorder %v283, 0.0
          %v285 = vsel %vm284, 1.0, 0.0
          %s286 = scalar_lea.vmem %s211, 6 [#allocation9]
          %287 = vst [vmem:[%s286] sm:$0x1] %v285
          %s288 = scalar_lea.vmem %s191, 7 [#allocation7]
          %v289 = vld [vmem:[%s288] sm:$0x1]
          %v290 = vmul.f32 %v283, 0.9
          %v291 = vmul.f32 %v289, 0.1
          %v292 = vadd.f32 %v290, %v291
          %v293 = vmul.f32 %v285, %v214
          %v294 = vsub.f32 %v292, %v293
          %vm295 = vcmp.gt.f32.partialorder %v294, 0.0
          %v296 = vsel %vm295, 1.0, 0.0
          %s297 = scalar_lea.vmem %s211, 7 [#allocation9]
          %298 = vst [vmem:[%s297] sm:$0x1] %v296
          %299 = vst [vmem:[#allocation2] sm:$0x1] %v294
          %300 = vst [vmem:[#allocation3] sm:$0x1] %v296
        $region40: #{tpu_custom_call.1} parent=27 // pred_fallthru
          _
        %p301 = scmp.gt.s32.totalorder %s27, 0
        // Predicated region
        $region41: #{tpu_custom_call.1} parent=27 // pred_check
          %p302 = pneg %p301
        $region42: #{tpu_custom_call.1} parent=27 // pred_check_branch
          %304 = sbr.rel (%p302) target = $region44
        $region43: #{tpu_custom_call.1} parent=27 // pred_region
          %v305 = vld [vmem:[#allocation2] sm:$0x1]
          %v306 = vld [vmem:[#allocation3] sm:$0x1]
          %v307 = vld [vmem:[%s191] sm:$0x1]
          %v308 = vmul.f32 %v305, 0.9
          %v309 = vmul.f32 %v307, 0.1
          %v310 = vadd.f32 %v308, %v309
          %v311 = vmul.f32 %v306, %v214
          %v312 = vsub.f32 %v310, %v311
          %vm313 = vcmp.gt.f32.partialorder %v312, 0.0
          %v314 = vsel %vm313, 1.0, 0.0
          %315 = vst [vmem:[%s211] sm:$0x1] %v314
          %s316 = scalar_lea.vmem %s191, 1 [#allocation7]
          %v317 = vld [vmem:[%s316] sm:$0x1]
          %v318 = vmul.f32 %v312, 0.9
          %v319 = vmul.f32 %v317, 0.1
          %v320 = vadd.f32 %v318, %v319
          %v321 = vmul.f32 %v314, %v214
          %v322 = vsub.f32 %v320, %v321
          %vm323 = vcmp.gt.f32.partialorder %v322, 0.0
          %v324 = vsel %vm323, 1.0, 0.0
          %s325 = scalar_lea.vmem %s211, 1 [#allocation9]
          %326 = vst [vmem:[%s325] sm:$0x1] %v324
          %s327 = scalar_lea.vmem %s191, 2 [#allocation7]
          %v328 = vld [vmem:[%s327] sm:$0x1]
          %v329 = vmul.f32 %v322, 0.9
          %v330 = vmul.f32 %v328, 0.1
          %v331 = vadd.f32 %v329, %v330
          %v332 = vmul.f32 %v324, %v214
          %v333 = vsub.f32 %v331, %v332
          %vm334 = vcmp.gt.f32.partialorder %v333, 0.0
          %v335 = vsel %vm334, 1.0, 0.0
          %s336 = scalar_lea.vmem %s211, 2 [#allocation9]
          %337 = vst [vmem:[%s336] sm:$0x1] %v335
          %s338 = scalar_lea.vmem %s191, 3 [#allocation7]
          %v339 = vld [vmem:[%s338] sm:$0x1]
          %v340 = vmul.f32 %v333, 0.9
          %v341 = vmul.f32 %v339, 0.1
          %v342 = vadd.f32 %v340, %v341
          %v343 = vmul.f32 %v335, %v214
          %v344 = vsub.f32 %v342, %v343
          %vm345 = vcmp.gt.f32.partialorder %v344, 0.0
          %v346 = vsel %vm345, 1.0, 0.0
          %s347 = scalar_lea.vmem %s211, 3 [#allocation9]
          %348 = vst [vmem:[%s347] sm:$0x1] %v346
          %s349 = scalar_lea.vmem %s191, 4 [#allocation7]
          %v350 = vld [vmem:[%s349] sm:$0x1]
          %v351 = vmul.f32 %v344, 0.9
          %v352 = vmul.f32 %v350, 0.1
          %v353 = vadd.f32 %v351, %v352
          %v354 = vmul.f32 %v346, %v214
          %v355 = vsub.f32 %v353, %v354
          %vm356 = vcmp.gt.f32.partialorder %v355, 0.0
          %v357 = vsel %vm356, 1.0, 0.0
          %s358 = scalar_lea.vmem %s211, 4 [#allocation9]
          %359 = vst [vmem:[%s358] sm:$0x1] %v357
          %s360 = scalar_lea.vmem %s191, 5 [#allocation7]
          %v361 = vld [vmem:[%s360] sm:$0x1]
          %v362 = vmul.f32 %v355, 0.9
          %v363 = vmul.f32 %v361, 0.1
          %v364 = vadd.f32 %v362, %v363
          %v365 = vmul.f32 %v357, %v214
          %v366 = vsub.f32 %v364, %v365
          %vm367 = vcmp.gt.f32.partialorder %v366, 0.0
          %v368 = vsel %vm367, 1.0, 0.0
          %s369 = scalar_lea.vmem %s211, 5 [#allocation9]
          %370 = vst [vmem:[%s369] sm:$0x1] %v368
          %s371 = scalar_lea.vmem %s191, 6 [#allocation7]
          %v372 = vld [vmem:[%s371] sm:$0x1]
          %v373 = vmul.f32 %v366, 0.9
          %v374 = vmul.f32 %v372, 0.1
          %v375 = vadd.f32 %v373, %v374
          %v376 = vmul.f32 %v368, %v214
          %v377 = vsub.f32 %v375, %v376
          %vm378 = vcmp.gt.f32.partialorder %v377, 0.0
          %v379 = vsel %vm378, 1.0, 0.0
          %s380 = scalar_lea.vmem %s211, 6 [#allocation9]
          %381 = vst [vmem:[%s380] sm:$0x1] %v379
          %s382 = scalar_lea.vmem %s191, 7 [#allocation7]
          %v383 = vld [vmem:[%s382] sm:$0x1]
          %v384 = vmul.f32 %v377, 0.9
          %v385 = vmul.f32 %v383, 0.1
          %v386 = vadd.f32 %v384, %v385
          %v387 = vmul.f32 %v379, %v214
          %v388 = vsub.f32 %v386, %v387
          %vm389 = vcmp.gt.f32.partialorder %v388, 0.0
          %v390 = vsel %vm389, 1.0, 0.0
          %s391 = scalar_lea.vmem %s211, 7 [#allocation9]
          %392 = vst [vmem:[%s391] sm:$0x1] %v390
          %393 = vst [vmem:[#allocation2] sm:$0x1] %v388
          %394 = vst [vmem:[#allocation3] sm:$0x1] %v390
        $region44: #{tpu_custom_call.1} parent=27 // pred_fallthru
          _
        %s395 = sand.u32 %s107, 1
        %s396 = scalar_lea.sflag [#allocation6], %s395
        %s397 = sand.u32 %s107, 1
        %s398 = smul.addr %s397, 8
        %s399 = scalar_lea.vmem [#allocation9], %s398
        // Predicated region
        $region45: #{tpu_custom_call.1} parent=27 // pred_check
          %p400 = pneg %p117
        $region46: #{tpu_custom_call.1} parent=27 // pred_check_branch
          %402 = sbr.rel (%p400) target = $region48
        $region47: #{tpu_custom_call.1} parent=27 // pred_region
          %s403 = smul.u32 8, %s27
          %s405 = ssub.s32 128, 128
          %406 = vsyncadd %s396, %s405
          %s407 = sadd.s32 %s26, %s403
          %s408 = smul.addr %s25, 8
          %s409 = sadd.s32 %s407, %s408
          %s410 = smul.addr %s409, 16
          %s411 = scalar_lea.hbm %s2, %s410
          %s412 = sshll.u32 %s399, 4
          %s413 = int_to_ptr.vmem [resolvable:$true] %s412
          %418 = dma.vmem_to_hbm [thread:$0]  %s413, 128, %s411, %s396, 16, 16, 1
        $region48: #{tpu_custom_call.1} parent=27 // pred_fallthru
          _
      $region28: #{tpu_custom_call.1} parent=5 // pred_fallthru
        _
      %p419 = scmp.le.s32.totalorder 2, %s15
      // Predicated region
      $region49: #{tpu_custom_call.1} parent=5 // pred_check
        %p420 = pneg %p419
      $region50: #{tpu_custom_call.1} parent=5 // pred_check_branch
        %422 = sbr.rel (%p420) target = $region52
      $region51: #{tpu_custom_call.1} parent=5 // pred_region
        %s423 = ssub.s32 %s15, 2
        // Predicated region
        $region53: #{tpu_custom_call.1} parent=51 // pred_check
          %p424 = pneg %p123
        $region54: #{tpu_custom_call.1} parent=51 // pred_check_branch
          %426 = sbr.rel (%p424) target = $region56
        $region55: #{tpu_custom_call.1} parent=51 // pred_region
          %s427 = sand.u32 %s108, 1
          %s428 = scalar_lea.sflag [#allocation6], %s427
          %s429 = sand.u32 %s108, 1
          %s430 = smul.addr %s429, 8
          %s431 = scalar_lea.vmem [#allocation9], %s430
          %432 = dma.done %s428, 128
        $region56: #{tpu_custom_call.1} parent=51 // pred_fallthru
          _
      $region52: #{tpu_custom_call.1} parent=5 // pred_fallthru
        _
    $region6: #{tpu_custom_call.1} parent=1 // loop_footer
      %s19 = sadd.s32 1, %s15
    $region7: #{tpu_custom_call.1} parent=1 // loop_footer_branch
      %14 = sbr.rel target = $region3
    $region8: #{tpu_custom_call.1} parent=1 // loop_exit
      _
    %433 = vsyncpa [#allocation5], 1
    %s434 = scalar_lea.sflag [#allocation5], 1
    %435 = vsyncpa %s434, 1
    %436 = vsyncpa [#allocation8], 1
    %s437 = scalar_lea.sflag [#allocation8], 1
    %438 = vsyncpa %s437, 1
    %439 = vsyncpa [#allocation6], 1
    %s440 = scalar_lea.sflag [#allocation6], 1
    %441 = vsyncpa %s440, 1

</llo_original>
